<compile_context>
chip_gen: v5e
topology: v5e:2x2
jax: 0.10.0
libtpu: 0.0.40
codegen_flags: <defaults>
</compile_context>

<pallas_src>
import functools

import jax
import jax.numpy as jnp
from jax.experimental import pallas as pl
from jax.experimental.pallas import tpu as pltpu


def _round_up(x, m):
    return ((x + m - 1) // m) * m


def autofusion_kernel(z_ref,
                      w1_ref, b1_ref, w2_ref, b2_ref,
                      w3_ref, b3_ref, w4_ref, b4_ref,
                      compressed_ref, partial_ref,
                      *, batch, tile_b):
    """One batch tile: 4 bf16 matmuls (f32 acc), 2 ReLUs, masked SSE partial sum."""
    z = z_ref[...]                              # (TB, F) f32
    z_bf = z.astype(jnp.bfloat16)

    # fuse_in: Linear -> ReLU -> Linear
    h1 = jnp.dot(z_bf, w1_ref[...], preferred_element_type=jnp.float32) + b1_ref[...]
    h1 = jnp.maximum(h1, 0.0)
    compressed = jnp.dot(h1.astype(jnp.bfloat16), w2_ref[...],
                         preferred_element_type=jnp.float32) + b2_ref[...]

    # fuse_out: Linear -> ReLU -> Linear
    h2 = jnp.dot(compressed.astype(jnp.bfloat16), w3_ref[...],
                 preferred_element_type=jnp.float32) + b3_ref[...]
    h2 = jnp.maximum(h2, 0.0)
    recon = jnp.dot(h2.astype(jnp.bfloat16), w4_ref[...],
                    preferred_element_type=jnp.float32) + b4_ref[...]

    # Per-tile squared-error partial sum; mask rows that are batch padding.
    row = (pl.program_id(0) * tile_b
           + jax.lax.broadcasted_iota(jnp.int32, (tile_b, 1), 0))
    valid = row < batch
    diff = recon - z
    sq = jnp.where(valid, diff * diff, 0.0)
    partial_ref[0, 0] = jnp.sum(sq)             # scalar -> SMEM slot for this tile

    compressed_ref[...] = compressed.astype(compressed_ref.dtype)


def autofusion_forward(z, params, *, block_batch=256):
    """z: (B, input_features) float32. params: f32 weights (in,out) / biases (1,out).

    Returns {'z': compressed_z (B, latent_dim) f32, 'loss': scalar f32}."""
    B, F = z.shape
    hidden = params["w1"].shape[1]
    latent = params["w2"].shape[1]
    hid_pad = _round_up(hidden, 128)
    lat_pad = _round_up(latent, 128)

    # Zero-pad the tiny weights to lane-dense widths (math is unchanged: padded
    # rows/cols are zero, padded bias entries are zero => padded activations
    # are exactly zero) and cast them to bf16 for the MXU. Biases stay f32.
    def padw(w, rows, cols):
        return jnp.pad(w, ((0, rows - w.shape[0]),
                           (0, cols - w.shape[1]))).astype(jnp.bfloat16)

    def padb(b, cols):
        return jnp.pad(b, ((0, 0), (0, cols - b.shape[1])))

    w1 = padw(params["w1"], F, hid_pad);        b1 = padb(params["b1"], hid_pad)
    w2 = padw(params["w2"], hid_pad, lat_pad);  b2 = padb(params["b2"], lat_pad)
    w3 = padw(params["w3"], lat_pad, hid_pad);  b3 = padb(params["b3"], hid_pad)
    w4 = padw(params["w4"], hid_pad, F);        b4 = params["b4"]

    # Batch tiling: TB rows per grid step (multiple of 8), batch zero-padded
    # to a tile multiple. Padded rows are masked out of the loss in-kernel.
    tb = min(block_batch, _round_up(B, 8))
    b_pad = _round_up(B, tb)
    num_tiles = b_pad // tb
    z_pad = jnp.pad(z, ((0, b_pad - B), (0, 0)))

    kernel = functools.partial(autofusion_kernel, batch=B, tile_b=tb)

    # Untiled VMEM specs: weights/biases stay resident across all grid steps.
    resident = pl.BlockSpec(memory_space=pltpu.MemorySpace.VMEM)

    compressed_pad, partials = pl.pallas_call(
        kernel,
        grid=(num_tiles,),
        out_shape=(
            jax.ShapeDtypeStruct((b_pad, lat_pad), jnp.float32),
            jax.ShapeDtypeStruct((num_tiles, 1), jnp.float32),
        ),
        in_specs=[pl.BlockSpec((tb, F), lambda i: (i, 0))] + [resident] * 8,
        out_specs=(
            pl.BlockSpec((tb, lat_pad), lambda i: (i, 0)),
            pl.BlockSpec((1, 1), lambda i: (i, 0),
                         memory_space=pltpu.MemorySpace.SMEM),
        ),
        compiler_params=pltpu.CompilerParams(
            dimension_semantics=("parallel",)),
    )(z_pad, w1, b1, w2, b2, w3, b3, w4, b4)

    loss = jnp.sum(partials) / jnp.float32(B * F)
    return {"z": compressed_pad[:B, :latent], "loss": loss}


def init_params(key, input_features, latent_dim):
    """Deterministic synthetic init. Weights stored as (in_dim, out_dim);
    biases as (1, out_dim)."""
    hidden = input_features // 2
    ks = jax.random.split(key, 8)

    def lin(kw, kb, fan_in, fan_out):
        bound = 1.0 / jnp.sqrt(jnp.float32(fan_in))
        w = jax.random.uniform(kw, (fan_in, fan_out), jnp.float32, -bound, bound)
        b = jax.random.uniform(kb, (1, fan_out), jnp.float32, -bound, bound)
        return w, b

    w1, b1 = lin(ks[0], ks[1], input_features, hidden)
    w2, b2 = lin(ks[2], ks[3], hidden, latent_dim)
    w3, b3 = lin(ks[4], ks[5], latent_dim, hidden)
    w4, b4 = lin(ks[6], ks[7], hidden, input_features)
    return {"w1": w1, "b1": b1, "w2": w2, "b2": b2,
            "w3": w3, "b3": b3, "w4": w4, "b4": b4}


def autofusion_reference_f32(z, params):
    """Pure-f32 JAX reference (matches the PyTorch module's math)."""
    h1 = jnp.maximum(z @ params["w1"] + params["b1"], 0.0)
    compressed = h1 @ params["w2"] + params["b2"]
    h2 = jnp.maximum(compressed @ params["w3"] + params["b3"], 0.0)
    recon = h2 @ params["w4"] + params["b4"]
    return {"z": compressed, "loss": jnp.mean((recon - z) ** 2)}


def autofusion_reference_bf16(z, params):
    """Mirrors the kernel's bf16-input / f32-accumulation matmuls."""
    def mm(x, w):
        return jnp.dot(x.astype(jnp.bfloat16), w.astype(jnp.bfloat16),
                       preferred_element_type=jnp.float32)

    h1 = jnp.maximum(mm(z, params["w1"]) + params["b1"], 0.0)
    compressed = mm(h1, params["w2"]) + params["b2"]
    h2 = jnp.maximum(mm(compressed, params["w3"]) + params["b3"], 0.0)
    recon = mm(h2, params["w4"]) + params["b4"]
    return {"z": compressed, "loss": jnp.mean((recon - z) ** 2)}


if __name__ == "__main__":
    key = jax.random.PRNGKey(0)
    k_param, k_data = jax.random.split(key)

    batch = 2
    input_features = 32
    latent_dim = 16

    params = init_params(k_param, input_features, latent_dim)
    z = jax.random.normal(k_data, (batch, input_features), jnp.float32)

    out = autofusion_forward(z, params)
    jax.block_until_ready(out)

    # Tight check vs. a reference that uses the same bf16/f32-acc matmuls.
    ref_bf16 = autofusion_reference_bf16(z, params)
    assert jnp.allclose(out["z"], ref_bf16["z"], atol=1e-4, rtol=1e-4)
    assert jnp.allclose(out["loss"], ref_bf16["loss"], atol=1e-4, rtol=1e-4)

    # Loose check vs. the pure-f32 reference (only difference is the bf16 cast).
    ref_f32 = autofusion_reference_f32(z, params)
    assert jnp.allclose(out["z"], ref_f32["z"], atol=3e-2, rtol=3e-2)
    assert jnp.allclose(out["loss"], ref_f32["loss"], atol=3e-2, rtol=3e-2)

    print("KERNEL_OK")
</pallas_src>

<mosaic_0001>
module attributes {stable_mosaic.version = 11 : i64} {
  func.func @autofusion_kernel(%arg0: i32, %arg1: memref<8x32xf32, #tpu.memory_space<vmem>>, %arg2: memref<32x128xbf16, #tpu.memory_space<vmem>>, %arg3: memref<1x128xf32, #tpu.memory_space<vmem>>, %arg4: memref<128x128xbf16, #tpu.memory_space<vmem>>, %arg5: memref<1x128xf32, #tpu.memory_space<vmem>>, %arg6: memref<128x128xbf16, #tpu.memory_space<vmem>>, %arg7: memref<1x128xf32, #tpu.memory_space<vmem>>, %arg8: memref<128x32xbf16, #tpu.memory_space<vmem>>, %arg9: memref<1x32xf32, #tpu.memory_space<vmem>>, %arg10: memref<8x128xf32, #tpu.memory_space<vmem>>, %arg11: memref<1x1xf32, #tpu.memory_space<smem>>) attributes {dimension_semantics = [#tpu.dimension_semantics<parallel>], iteration_bounds = array<i64: 1>, scalar_prefetch = 0 : i64, scratch_operands = 0 : i64, tpu.core_type = #tpu.core_type<tc>, window_params = [{transform_indices = @transform_0, window_bounds = array<i64: 8, 32>}, {pipeline_mode = #tpu.pipeline_mode<synchronous>, transform_indices = @transform_1, window_bounds = array<i64: 32, 128>}, {pipeline_mode = #tpu.pipeline_mode<synchronous>, transform_indices = @transform_2, window_bounds = array<i64: 1, 128>}, {pipeline_mode = #tpu.pipeline_mode<synchronous>, transform_indices = @transform_3, window_bounds = array<i64: 128, 128>}, {pipeline_mode = #tpu.pipeline_mode<synchronous>, transform_indices = @transform_4, window_bounds = array<i64: 1, 128>}, {pipeline_mode = #tpu.pipeline_mode<synchronous>, transform_indices = @transform_5, window_bounds = array<i64: 128, 128>}, {pipeline_mode = #tpu.pipeline_mode<synchronous>, transform_indices = @transform_6, window_bounds = array<i64: 1, 128>}, {pipeline_mode = #tpu.pipeline_mode<synchronous>, transform_indices = @transform_7, window_bounds = array<i64: 128, 32>}, {pipeline_mode = #tpu.pipeline_mode<synchronous>, transform_indices = @transform_8, window_bounds = array<i64: 1, 32>}, {transform_indices = @transform_9, window_bounds = array<i64: 8, 128>}, {transform_indices = @transform_10, window_bounds = array<i64: 1, 1>}]} {
    %c0 = arith.constant 0 : index
    %c0_0 = arith.constant 0 : index
    %0 = vector.load %arg1[%c0, %c0_0] : memref<8x32xf32, #tpu.memory_space<vmem>>, vector<8x32xf32>
    %1 = arith.truncf %0 : vector<8x32xf32> to vector<8x32xbf16>
    %c0_1 = arith.constant 0 : index
    %c0_2 = arith.constant 0 : index
    %2 = vector.load %arg2[%c0_1, %c0_2] : memref<32x128xbf16, #tpu.memory_space<vmem>>, vector<32x128xbf16>
    %cst = arith.constant dense<0.000000e+00> : vector<8x128xf32>
    %3 = tpu.matmul %1, %2, %cst {dimension_numbers = #tpu.dot_dimension_numbers<[1], [0], [0], [1], [0, 0, 1, 1], [], []>} : vector<8x32xbf16>, vector<32x128xbf16>, vector<8x128xf32> -> vector<8x128xf32>
    %c0_3 = arith.constant 0 : index
    %c0_4 = arith.constant 0 : index
    %4 = vector.load %arg3[%c0_3, %c0_4] : memref<1x128xf32, #tpu.memory_space<vmem>>, vector<1x128xf32>
    %5 = vector.broadcast %4 : vector<1x128xf32> to vector<8x128xf32>
    %6 = arith.addf %3, %5 : vector<8x128xf32>
    %cst_5 = arith.constant 0.000000e+00 : f32
    %7 = vector.broadcast %cst_5 : f32 to vector<8x128xf32>
    %8 = arith.maximumf %6, %7 : vector<8x128xf32>
    %9 = arith.truncf %8 : vector<8x128xf32> to vector<8x128xbf16>
    %c0_6 = arith.constant 0 : index
    %c0_7 = arith.constant 0 : index
    %10 = vector.load %arg4[%c0_6, %c0_7] : memref<128x128xbf16, #tpu.memory_space<vmem>>, vector<128x128xbf16>
    %cst_8 = arith.constant dense<0.000000e+00> : vector<8x128xf32>
    %11 = tpu.matmul %9, %10, %cst_8 {dimension_numbers = #tpu.dot_dimension_numbers<[1], [0], [0], [1], [0, 0, 1, 1], [], []>} : vector<8x128xbf16>, vector<128x128xbf16>, vector<8x128xf32> -> vector<8x128xf32>
    %c0_9 = arith.constant 0 : index
    %c0_10 = arith.constant 0 : index
    %12 = vector.load %arg5[%c0_9, %c0_10] : memref<1x128xf32, #tpu.memory_space<vmem>>, vector<1x128xf32>
    %13 = vector.broadcast %12 : vector<1x128xf32> to vector<8x128xf32>
    %14 = arith.addf %11, %13 : vector<8x128xf32>
    %15 = arith.truncf %14 : vector<8x128xf32> to vector<8x128xbf16>
    %c0_11 = arith.constant 0 : index
    %c0_12 = arith.constant 0 : index
    %16 = vector.load %arg6[%c0_11, %c0_12] : memref<128x128xbf16, #tpu.memory_space<vmem>>, vector<128x128xbf16>
    %cst_13 = arith.constant dense<0.000000e+00> : vector<8x128xf32>
    %17 = tpu.matmul %15, %16, %cst_13 {dimension_numbers = #tpu.dot_dimension_numbers<[1], [0], [0], [1], [0, 0, 1, 1], [], []>} : vector<8x128xbf16>, vector<128x128xbf16>, vector<8x128xf32> -> vector<8x128xf32>
    %c0_14 = arith.constant 0 : index
    %c0_15 = arith.constant 0 : index
    %18 = vector.load %arg7[%c0_14, %c0_15] : memref<1x128xf32, #tpu.memory_space<vmem>>, vector<1x128xf32>
    %19 = vector.broadcast %18 : vector<1x128xf32> to vector<8x128xf32>
    %20 = arith.addf %17, %19 : vector<8x128xf32>
    %cst_16 = arith.constant 0.000000e+00 : f32
    %21 = vector.broadcast %cst_16 : f32 to vector<8x128xf32>
    %22 = arith.maximumf %20, %21 : vector<8x128xf32>
    %23 = arith.truncf %22 : vector<8x128xf32> to vector<8x128xbf16>
    %c0_17 = arith.constant 0 : index
    %c0_18 = arith.constant 0 : index
    %24 = vector.load %arg8[%c0_17, %c0_18] : memref<128x32xbf16, #tpu.memory_space<vmem>>, vector<128x32xbf16>
    %cst_19 = arith.constant dense<0.000000e+00> : vector<8x32xf32>
    %25 = tpu.matmul %23, %24, %cst_19 {dimension_numbers = #tpu.dot_dimension_numbers<[1], [0], [0], [1], [0, 0, 1, 1], [], []>} : vector<8x128xbf16>, vector<128x32xbf16>, vector<8x32xf32> -> vector<8x32xf32>
    %c0_20 = arith.constant 0 : index
    %c0_21 = arith.constant 0 : index
    %26 = vector.load %arg9[%c0_20, %c0_21] : memref<1x32xf32, #tpu.memory_space<vmem>>, vector<1x32xf32>
    %27 = vector.broadcast %26 : vector<1x32xf32> to vector<8x32xf32>
    %28 = arith.addf %25, %27 : vector<8x32xf32>
    %c8_i32 = arith.constant 8 : i32
    %29 = arith.muli %arg0, %c8_i32 : i32
    %30 = tpu.iota {dimensions = array<i32: 0>} : vector<8x1xi32>
    %31 = vector.broadcast %29 : i32 to vector<8x1xi32>
    %32 = arith.addi %31, %30 : vector<8x1xi32>
    %c2_i32 = arith.constant 2 : i32
    %33 = vector.broadcast %c2_i32 : i32 to vector<8x1xi32>
    %34 = arith.cmpi slt, %32, %33 : vector<8x1xi32>
    %35 = arith.subf %28, %0 : vector<8x32xf32>
    %36 = arith.mulf %35, %35 : vector<8x32xf32>
    %cst_22 = arith.constant 0.000000e+00 : f32
    %37 = vector.shape_cast %34 : vector<8x1xi1> to vector<8x1xi1>
    %38 = vector.broadcast %37 : vector<8x1xi1> to vector<8x32xi1>
    %39 = vector.broadcast %cst_22 : f32 to vector<8x32xf32>
    %40 = arith.select %38, %36, %39 : vector<8x32xi1>, vector<8x32xf32>
    %41 = vector.shape_cast %40 : vector<8x32xf32> to vector<1x8x32xf32>
    %cst_23 = arith.constant dense<0.000000e+00> : vector<1xf32>
    %42 = vector.multi_reduction <add>, %41, %cst_23 [1, 2] : vector<1x8x32xf32> to vector<1xf32>
    %43 = vector.shape_cast %42 : vector<1xf32> to vector<1x1x1xf32>
    %44 = vector.extract %43[0, 0, 0] : f32 from vector<1x1x1xf32>
    %c0_24 = arith.constant 0 : index
    %c0_25 = arith.constant 0 : index
    %45 = memref.load %arg11[%c0_24, %c0_25] : memref<1x1xf32, #tpu.memory_space<smem>>
    memref.store %44, %arg11[%c0_24, %c0_25] : memref<1x1xf32, #tpu.memory_space<smem>>
    %c0_26 = arith.constant 0 : index
    %c0_27 = arith.constant 0 : index
    %46 = vector.load %arg10[%c0_26, %c0_27] : memref<8x128xf32, #tpu.memory_space<vmem>>, vector<8x128xf32>
    tpu.vector_store %arg10[%c0_26, %c0_27], %14 {strides = array<i32>} : memref<8x128xf32, #tpu.memory_space<vmem>>, vector<8x128xf32>,
    return
  }
  func.func @transform_0(%arg0: i32) -> (i32, i32) {
    %c0_i32 = arith.constant 0 : i32
    %c0_i32_0 = arith.constant 0 : i32
    return %arg0, %c0_i32 : i32, i32
  }
  func.func @transform_1(%arg0: i32) -> (i32, i32) {
    %c0_i32 = arith.constant 0 : i32
    %c0_i32_0 = arith.constant 0 : i32
    %c0_i32_1 = arith.constant 0 : i32
    return %c0_i32, %c0_i32_0 : i32, i32
  }
  func.func @transform_2(%arg0: i32) -> (i32, i32) {
    %c0_i32 = arith.constant 0 : i32
    %c0_i32_0 = arith.constant 0 : i32
    %c0_i32_1 = arith.constant 0 : i32
    return %c0_i32, %c0_i32_0 : i32, i32
  }
  func.func @transform_3(%arg0: i32) -> (i32, i32) {
    %c0_i32 = arith.constant 0 : i32
    %c0_i32_0 = arith.constant 0 : i32
    %c0_i32_1 = arith.constant 0 : i32
    return %c0_i32, %c0_i32_0 : i32, i32
  }
  func.func @transform_4(%arg0: i32) -> (i32, i32) {
    %c0_i32 = arith.constant 0 : i32
    %c0_i32_0 = arith.constant 0 : i32
    %c0_i32_1 = arith.constant 0 : i32
    return %c0_i32, %c0_i32_0 : i32, i32
  }
  func.func @transform_5(%arg0: i32) -> (i32, i32) {
    %c0_i32 = arith.constant 0 : i32
    %c0_i32_0 = arith.constant 0 : i32
    %c0_i32_1 = arith.constant 0 : i32
    return %c0_i32, %c0_i32_0 : i32, i32
  }
  func.func @transform_6(%arg0: i32) -> (i32, i32) {
    %c0_i32 = arith.constant 0 : i32
    %c0_i32_0 = arith.constant 0 : i32
    %c0_i32_1 = arith.constant 0 : i32
    return %c0_i32, %c0_i32_0 : i32, i32
  }
  func.func @transform_7(%arg0: i32) -> (i32, i32) {
    %c0_i32 = arith.constant 0 : i32
    %c0_i32_0 = arith.constant 0 : i32
    %c0_i32_1 = arith.constant 0 : i32
    return %c0_i32, %c0_i32_0 : i32, i32
  }
  func.func @transform_8(%arg0: i32) -> (i32, i32) {
    %c0_i32 = arith.constant 0 : i32
    %c0_i32_0 = arith.constant 0 : i32
    %c0_i32_1 = arith.constant 0 : i32
    return %c0_i32, %c0_i32_0 : i32, i32
  }
  func.func @transform_9(%arg0: i32) -> (i32, i32) {
    %c0_i32 = arith.constant 0 : i32
    %c0_i32_0 = arith.constant 0 : i32
    return %arg0, %c0_i32 : i32, i32
  }
  func.func @transform_10(%arg0: i32) -> (i32, i32) {
    %c0_i32 = arith.constant 0 : i32
    %c0_i32_0 = arith.constant 0 : i32
    return %arg0, %c0_i32 : i32, i32
  }
}

</mosaic_0001>

<llo_original>
// kernel: tpu_custom_call.1
$region0: #{tpu_custom_call.1}
  #allocation0 [shape = 'u32[]', space=smem, size = 0x4, offset = 0x4, fixed_abs, tag = 'smem constant byte address 0x4 - core index']
  #allocation1 [shape = 'u32[72,128]{1,0:T(1,128)}', space=vmem, size = 0x9000, scoped, tag = 'internal scratch']
  %s0 = inlined_call_operand.hbm [shape: f32[8,32], index: 0, kind: input, shape index: {}]
  %s1 = inlined_call_operand.vmem [shape: bf16[32,128], index: 1, kind: input, shape index: {}]
  %s2 = inlined_call_operand.vmem [shape: f32[1,128], index: 2, kind: input, shape index: {}]
  %s3 = inlined_call_operand.vmem [shape: bf16[128,128], index: 3, kind: input, shape index: {}]
  %s4 = inlined_call_operand.vmem [shape: f32[1,128], index: 4, kind: input, shape index: {}]
  %s5 = inlined_call_operand.hbm [shape: bf16[128,128], index: 5, kind: input, shape index: {}]
  %s6 = inlined_call_operand.vmem [shape: f32[1,128], index: 6, kind: input, shape index: {}]
  %s7 = inlined_call_operand.vmem [shape: bf16[128,32], index: 7, kind: input, shape index: {}]
  %s8 = inlined_call_operand.vmem [shape: f32[1,32], index: 8, kind: input, shape index: {}]
  %s9 = inlined_call_operand.hbm [shape: f32[8,128], index: 9, kind: output, shape index: {0}]
  %s10 = inlined_call_operand.hbm [shape: f32[1,1], index: 10, kind: output, shape index: {1}]
  %11 = xla_tuple %s9, %s10
  %s12 = sld [smem:[#allocation0]]
  $region62: #{tpu_custom_call.1} parent=0
    _
  %s14 = ssub.s32 1, %s12
  %s15 = scalar_select 0, %s14, %s12
  $region1: #{tpu_custom_call.1} parent=0
    #allocation2 [shape = 'u8[4096]{0}', space=vmem, size = 0x1000, scoped, tag = 'input window, operand 0, single buffered']
    #allocation3 [shape = 's32[1]{0}', space=sflag, size = 0x4, scoped, tag = 'scoped memory for tpu_custom_call.1']
    #allocation4 [shape = 's32[1]{0}', space=sflag, size = 0x4, scoped, tag = 'scoped memory for tpu_custom_call.1']
    #allocation5 [shape = 's32[1]{0}', space=sflag, size = 0x4, scoped, tag = 'scoped memory for tpu_custom_call.1']
    #allocation6 [shape = 'u8[32768]{0}', space=vmem, size = 0x8000, scoped, tag = 'input window, operand 5, single buffered']
    #allocation7 [shape = 's32[1]{0}', space=sflag, size = 0x4, scoped, tag = 'scoped memory for tpu_custom_call.1']
    #allocation8 [shape = 'u8[4096]{0}', space=vmem, size = 0x1000, scoped, tag = 'output window, operand 0, single buffered']
    #allocation9 [shape = 'u8[512]{0}', space=smem, size = 0x200, scoped, tag = 'output window, operand 1, single buffered']
    %16 = vsyncpa [#allocation3], 0
    %17 = vsyncpa [#allocation7], 0
    %18 = vsyncpa [#allocation4], 0
    %19 = vsyncpa [#allocation5], 0
    // Predicated region
    $region2: #{tpu_custom_call.1} parent=1 // pred_check
      _
    $region3: #{tpu_custom_call.1} parent=1 // pred_check_branch
      %21 = sbr.rel (0) target = $region5
    $region4: #{tpu_custom_call.1} parent=1 // pred_region
      %23 = vsyncadd [#allocation3], 0
      %s25 = sshll.u32 %s0, 4
      %s26 = int_to_ptr.hbm [resolvable:$true] %s25
      %s27 = sshll.u32 [#allocation2], 4
      %s28 = int_to_ptr.vmem [resolvable:$true] %s27
      %30 = dma.hbm_to_vmem [thread:$0]  %s26, 128, %s28, [#allocation3]
    $region5: #{tpu_custom_call.1} parent=1 // pred_fallthru
      _
    // Predicated region
    $region6: #{tpu_custom_call.1} parent=1 // pred_check
      _
    $region7: #{tpu_custom_call.1} parent=1 // pred_check_branch
      %32 = sbr.rel (0) target = $region9
    $region8: #{tpu_custom_call.1} parent=1 // pred_region
      _
    $region9: #{tpu_custom_call.1} parent=1 // pred_fallthru
      _
    // Predicated region
    $region10: #{tpu_custom_call.1} parent=1 // pred_check
      _
    $region11: #{tpu_custom_call.1} parent=1 // pred_check_branch
      %34 = sbr.rel (0) target = $region13
    $region12: #{tpu_custom_call.1} parent=1 // pred_region
      _
    $region13: #{tpu_custom_call.1} parent=1 // pred_fallthru
      _
    // Predicated region
    $region14: #{tpu_custom_call.1} parent=1 // pred_check
      _
    $region15: #{tpu_custom_call.1} parent=1 // pred_check_branch
      %36 = sbr.rel (0) target = $region17
    $region16: #{tpu_custom_call.1} parent=1 // pred_region
      _
    $region17: #{tpu_custom_call.1} parent=1 // pred_fallthru
      _
    // Predicated region
    $region18: #{tpu_custom_call.1} parent=1 // pred_check
      _
    $region19: #{tpu_custom_call.1} parent=1 // pred_check_branch
      %38 = sbr.rel (0) target = $region21
    $region20: #{tpu_custom_call.1} parent=1 // pred_region
      _
    $region21: #{tpu_custom_call.1} parent=1 // pred_fallthru
      _
    // Predicated region
    $region22: #{tpu_custom_call.1} parent=1 // pred_check
      _
    $region23: #{tpu_custom_call.1} parent=1 // pred_check_branch
      %40 = sbr.rel (0) target = $region25
    $region24: #{tpu_custom_call.1} parent=1 // pred_region
      %42 = vsyncadd [#allocation7], 0
      %s43 = sshll.u32 %s5, 4
      %s44 = int_to_ptr.hbm [resolvable:$true] %s43
      %s45 = sshll.u32 [#allocation6], 4
      %s46 = int_to_ptr.vmem [resolvable:$true] %s45
      %51 = dma.hbm_to_vmem [thread:$0]  %s44, 1024, %s46, [#allocation7], 64, 64, 4
    $region25: #{tpu_custom_call.1} parent=1 // pred_fallthru
      _
    // Predicated region
    $region26: #{tpu_custom_call.1} parent=1 // pred_check
      _
    $region27: #{tpu_custom_call.1} parent=1 // pred_check_branch
      %53 = sbr.rel (0) target = $region29
    $region28: #{tpu_custom_call.1} parent=1 // pred_region
      _
    $region29: #{tpu_custom_call.1} parent=1 // pred_fallthru
      _
    // Predicated region
    $region30: #{tpu_custom_call.1} parent=1 // pred_check
      _
    $region31: #{tpu_custom_call.1} parent=1 // pred_check_branch
      %55 = sbr.rel (0) target = $region33
    $region32: #{tpu_custom_call.1} parent=1 // pred_region
      _
    $region33: #{tpu_custom_call.1} parent=1 // pred_fallthru
      _
    // Predicated region
    $region34: #{tpu_custom_call.1} parent=1 // pred_check
      _
    $region35: #{tpu_custom_call.1} parent=1 // pred_check_branch
      %57 = sbr.rel (0) target = $region37
    $region36: #{tpu_custom_call.1} parent=1 // pred_region
      _
    $region37: #{tpu_custom_call.1} parent=1 // pred_fallthru
      _
    // Predicated region
    $region38: #{tpu_custom_call.1} parent=1 // pred_check
      _
    $region39: #{tpu_custom_call.1} parent=1 // pred_check_branch
      %59 = sbr.rel (0) target = $region41
    $region40: #{tpu_custom_call.1} parent=1 // pred_region
      %61 = dma.done [#allocation3], 128
    $region41: #{tpu_custom_call.1} parent=1 // pred_fallthru
      _
    // Predicated region
    $region42: #{tpu_custom_call.1} parent=1 // pred_check
      _
    $region43: #{tpu_custom_call.1} parent=1 // pred_check_branch
      %63 = sbr.rel (0) target = $region45
    $region44: #{tpu_custom_call.1} parent=1 // pred_region
      %65 = dma.done [#allocation7], 1024
    $region45: #{tpu_custom_call.1} parent=1 // pred_fallthru
      _
    %v67 = vld [vmem:[#allocation2] sm:$0xff]
    %v68 = vpack.c.bf16 %v67, %v67
    %v69 = vld [vmem:[%s1] sm:$0xf]
    %v70 = vld [vmem:[%s1 + $0x4] sm:$0xf]
    %v71 = vld [vmem:[%s1 + $0x8] sm:$0xf]
    %v72 = vld [vmem:[%s1 + $0xc] sm:$0xf]
    %v73 = vld [vmem:[%s2] sm:$0x1]
    %v75 = vperm.slane %v73, 0
    %v81 = vunpack.c.l.b16 %v69
    %v82 = vunpack.c.l.b16 %v70
    %v83 = vunpack.c.l.b16 %v71
    %v84 = vunpack.c.l.b16 %v72
    %v85 = vpack.c.b16 %v82, %v81
    %v86 = vpack.c.b16 %v84, %v83
    %vm89 = vcmask 261120
    %v91 = vsel %vm89, %v68, 0
    %93 = vmatpush.bf16.msra.mxu0 0
    %94 = vmatpush.bf16.msra.mxu0 0
    %95 = vmatpush.bf16.msra.mxu0 0
    %96 = vmatpush.bf16.msra.mxu0 0
    %97 = vmatpush.bf16.msra.mxu0 0
    %98 = vmatpush.bf16.msra.mxu0 0
    %99 = vmatpush.bf16.msra.mxu0 %v86
    %100 = vmatpush.bf16.msra.mxu0 %v85
    %101 = vmatmul.bf16.gmra.mxu0 %v91
    %v102 = vpop.f32.mrf.mxu0
    %v103 = vadd.f32 %v75, %v102
    %v104 = vpop.f32.mrf.mxu0
    %105 = vdwg.mxu0
    %v106 = vmax.f32 %v103, 0.0
    %v107 = vpack.c.bf16 %v106, %v106
    %v108 = vld [vmem:[%s3] sm:$0xf]
    %v109 = vld [vmem:[%s3 + $0x4] sm:$0xf]
    %v110 = vld [vmem:[%s3 + $0x8] sm:$0xf]
    %v111 = vld [vmem:[%s3 + $0xc] sm:$0xf]
    %v112 = vld [vmem:[%s3 + $0x10] sm:$0xf]
    %v113 = vld [vmem:[%s3 + $0x14] sm:$0xf]
    %v114 = vld [vmem:[%s3 + $0x18] sm:$0xf]
    %v115 = vld [vmem:[%s3 + $0x1c] sm:$0xf]
    %v116 = vld [vmem:[%s3 + $0x20] sm:$0xf]
    %v117 = vld [vmem:[%s3 + $0x24] sm:$0xf]
    %v118 = vld [vmem:[%s3 + $0x28] sm:$0xf]
    %v119 = vld [vmem:[%s3 + $0x2c] sm:$0xf]
    %v120 = vld [vmem:[%s3 + $0x30] sm:$0xf]
    %v121 = vld [vmem:[%s3 + $0x34] sm:$0xf]
    %v122 = vld [vmem:[%s3 + $0x38] sm:$0xf]
    %v123 = vld [vmem:[%s3 + $0x3c] sm:$0xf]
    %v124 = vld [vmem:[%s4] sm:$0x1]
    %v126 = vperm.slane %v124, 0
    %v144 = vunpack.c.l.b16 %v108
    %v145 = vunpack.c.l.b16 %v109
    %v146 = vunpack.c.l.b16 %v110
    %v147 = vunpack.c.l.b16 %v111
    %v148 = vunpack.c.l.b16 %v112
    %v149 = vunpack.c.l.b16 %v113
    %v150 = vunpack.c.l.b16 %v114
    %v151 = vunpack.c.l.b16 %v115
    %v152 = vunpack.c.l.b16 %v116
    %v153 = vunpack.c.l.b16 %v117
    %v154 = vunpack.c.l.b16 %v118
    %v155 = vunpack.c.l.b16 %v119
    %v156 = vunpack.c.l.b16 %v120
    %v157 = vunpack.c.l.b16 %v121
    %v158 = vunpack.c.l.b16 %v122
    %v159 = vunpack.c.l.b16 %v123
    %v160 = vpack.c.b16 %v145, %v144
    %v161 = vpack.c.b16 %v147, %v146
    %v162 = vpack.c.b16 %v149, %v148
    %v163 = vpack.c.b16 %v151, %v150
    %v164 = vpack.c.b16 %v153, %v152
    %v165 = vpack.c.b16 %v155, %v154
    %v166 = vpack.c.b16 %v157, %v156
    %v167 = vpack.c.b16 %v159, %v158
    %176 = vmatpush.bf16.msra.mxu0 %v167
    %177 = vmatpush.bf16.msra.mxu0 %v166
    %178 = vmatpush.bf16.msra.mxu0 %v165
    %179 = vmatpush.bf16.msra.mxu0 %v164
    %180 = vmatpush.bf16.msra.mxu0 %v163
    %181 = vmatpush.bf16.msra.mxu0 %v162
    %182 = vmatpush.bf16.msra.mxu0 %v161
    %183 = vmatpush.bf16.msra.mxu0 %v160
    %184 = vmatmul.bf16.gmra.mxu0 %v107
    %v185 = vpop.f32.mrf.mxu0
    %v186 = vadd.f32 %v126, %v185
    %v187 = vpop.f32.mrf.mxu0
    %188 = vdwg.mxu0
    %v189 = vpack.c.bf16 %v186, %v186
    %v190 = vld [vmem:[#allocation6] sm:$0xf]
    %v191 = vld [vmem:[#allocation6 + $0x4] sm:$0xf]
    %v192 = vld [vmem:[#allocation6 + $0x8] sm:$0xf]
    %v193 = vld [vmem:[#allocation6 + $0xc] sm:$0xf]
    %v194 = vld [vmem:[#allocation6 + $0x10] sm:$0xf]
    %v195 = vld [vmem:[#allocation6 + $0x14] sm:$0xf]
    %v196 = vld [vmem:[#allocation6 + $0x18] sm:$0xf]
    %v197 = vld [vmem:[#allocation6 + $0x1c] sm:$0xf]
    %v198 = vld [vmem:[#allocation6 + $0x20] sm:$0xf]
    %v199 = vld [vmem:[#allocation6 + $0x24] sm:$0xf]
    %v200 = vld [vmem:[#allocation6 + $0x28] sm:$0xf]
    %v201 = vld [vmem:[#allocation6 + $0x2c] sm:$0xf]
    %v202 = vld [vmem:[#allocation6 + $0x30] sm:$0xf]
    %v203 = vld [vmem:[#allocation6 + $0x34] sm:$0xf]
    %v204 = vld [vmem:[#allocation6 + $0x38] sm:$0xf]
    %v205 = vld [vmem:[#allocation6 + $0x3c] sm:$0xf]
    %v206 = vld [vmem:[%s6] sm:$0x1]
    %v208 = vperm.slane %v206, 0
    %v226 = vunpack.c.l.b16 %v190
    %v227 = vunpack.c.l.b16 %v191
    %v228 = vunpack.c.l.b16 %v192
    %v229 = vunpack.c.l.b16 %v193
    %v230 = vunpack.c.l.b16 %v194
    %v231 = vunpack.c.l.b16 %v195
    %v232 = vunpack.c.l.b16 %v196
    %v233 = vunpack.c.l.b16 %v197
    %v234 = vunpack.c.l.b16 %v198
    %v235 = vunpack.c.l.b16 %v199
    %v236 = vunpack.c.l.b16 %v200
    %v237 = vunpack.c.l.b16 %v201
    %v238 = vunpack.c.l.b16 %v202
    %v239 = vunpack.c.l.b16 %v203
    %v240 = vunpack.c.l.b16 %v204
    %v241 = vunpack.c.l.b16 %v205
    %v242 = vpack.c.b16 %v227, %v226
    %v243 = vpack.c.b16 %v229, %v228
    %v244 = vpack.c.b16 %v231, %v230
    %v245 = vpack.c.b16 %v233, %v232
    %v246 = vpack.c.b16 %v235, %v234
    %v247 = vpack.c.b16 %v237, %v236
    %v248 = vpack.c.b16 %v239, %v238
    %v249 = vpack.c.b16 %v241, %v240
    %258 = vmatpush.bf16.msra.mxu0 %v249
    %259 = vmatpush.bf16.msra.mxu0 %v248
    %260 = vmatpush.bf16.msra.mxu0 %v247
    %261 = vmatpush.bf16.msra.mxu0 %v246
    %262 = vmatpush.bf16.msra.mxu0 %v245
    %263 = vmatpush.bf16.msra.mxu0 %v244
    %264 = vmatpush.bf16.msra.mxu0 %v243
    %265 = vmatpush.bf16.msra.mxu0 %v242
    %266 = vmatmul.bf16.gmra.mxu0 %v189
    %v267 = vpop.f32.mrf.mxu0
    %v268 = vadd.f32 %v208, %v267
    %v269 = vpop.f32.mrf.mxu0
    %270 = vdwg.mxu0
    %v271 = vmax.f32 %v268, 0.0
    %v272 = vpack.c.bf16 %v271, %v271
    %v273 = vld [vmem:[%s7] sm:$0xf]
    %v274 = vld [vmem:[%s7 + $0x4] sm:$0xf]
    %v275 = vld [vmem:[%s7 + $0x8] sm:$0xf]
    %v276 = vld [vmem:[%s7 + $0xc] sm:$0xf]
    %v277 = vld [vmem:[%s7 + $0x10] sm:$0xf]
    %v278 = vld [vmem:[%s7 + $0x14] sm:$0xf]
    %v279 = vld [vmem:[%s7 + $0x18] sm:$0xf]
    %v280 = vld [vmem:[%s7 + $0x1c] sm:$0xf]
    %v281 = vld [vmem:[%s7 + $0x20] sm:$0xf]
    %v282 = vld [vmem:[%s7 + $0x24] sm:$0xf]
    %v283 = vld [vmem:[%s7 + $0x28] sm:$0xf]
    %v284 = vld [vmem:[%s7 + $0x2c] sm:$0xf]
    %v285 = vld [vmem:[%s7 + $0x30] sm:$0xf]
    %v286 = vld [vmem:[%s7 + $0x34] sm:$0xf]
    %v287 = vld [vmem:[%s7 + $0x38] sm:$0xf]
    %v288 = vld [vmem:[%s7 + $0x3c] sm:$0xf]
    %v289 = vld [vmem:[%s8] sm:$0x1]
    %v291 = vperm.slane %v289, 0
    %v309 = vunpack.c.l.b16 %v273
    %v310 = vunpack.c.l.b16 %v274
    %v311 = vunpack.c.l.b16 %v275
    %v312 = vunpack.c.l.b16 %v276
    %v313 = vunpack.c.l.b16 %v277
    %v314 = vunpack.c.l.b16 %v278
    %v315 = vunpack.c.l.b16 %v279
    %v316 = vunpack.c.l.b16 %v280
    %v317 = vunpack.c.l.b16 %v281
    %v318 = vunpack.c.l.b16 %v282
    %v319 = vunpack.c.l.b16 %v283
    %v320 = vunpack.c.l.b16 %v284
    %v321 = vunpack.c.l.b16 %v285
    %v322 = vunpack.c.l.b16 %v286
    %v323 = vunpack.c.l.b16 %v287
    %v324 = vunpack.c.l.b16 %v288
    %v325 = vpack.c.b16 %v310, %v309
    %v326 = vpack.c.b16 %v312, %v311
    %v327 = vpack.c.b16 %v314, %v313
    %v328 = vpack.c.b16 %v316, %v315
    %v329 = vpack.c.b16 %v318, %v317
    %v330 = vpack.c.b16 %v320, %v319
    %v331 = vpack.c.b16 %v322, %v321
    %v332 = vpack.c.b16 %v324, %v323
    %341 = vmatpush.bf16.msra.mxu0 %v332
    %342 = vmatpush.bf16.msra.mxu0 %v331
    %343 = vmatpush.bf16.msra.mxu0 %v330
    %344 = vmatpush.bf16.msra.mxu0 %v329
    %345 = vmatpush.bf16.msra.mxu0 %v328
    %346 = vmatpush.bf16.msra.mxu0 %v327
    %347 = vmatpush.bf16.msra.mxu0 %v326
    %348 = vmatpush.bf16.msra.mxu0 %v325
    %349 = vmatmul.bf16.gmra.mxu0 %v272
    %v350 = vpop.f32.mrf.mxu0
    %v351 = vadd.f32 %v291, %v350
    %v352 = vpop.f32.mrf.mxu0
    %353 = vdwg.mxu0
    %s354 = smul.u32 0, 8
    %v355 = vlaneseq
    %v356 = vshrl.u32 %v355, 7
    %v357 = vstv %s354
    %v358 = vadd.s32 %v357, %v356
    %vm359 = vcmp.lt.s32.totalorder %v358, 2
    %v360 = vsub.f32 %v351, %v67
    %v361 = vmul.f32 %v360, %v360
    %v362 = vsel %vm359, 1, 0
    %vm363 = vcmp.eq.s32.totalorder %v362, 1
    %v364 = vsel %vm363, %v361, 0.0
    %v365 = vsel %vm89, %v364, 0.0
    %366 = vadd.xlane.f32.xlu0 %v365
    %v367 = vpop.xlane.xlu0 %366
    %v368 = vrot.slane %v367, 4
    %v369 = vadd.f32 %v367, %v368
    %v370 = vrot.slane %v369, 2
    %v371 = vadd.f32 %v369, %v370
    %v372 = vrot.slane %v371, 1
    %v373 = vadd.f32 %v371, %v372
    %s374 = vtos %v373
    %s375 = scalar_lea.smem [#allocation9], 0
    %376 = sst [smem:[%s375]] %s374
    %377 = vst [vmem:[#allocation8] sm:$0xff] %v186
    // Predicated region
    $region46: #{tpu_custom_call.1} parent=1 // pred_check
      _
    $region47: #{tpu_custom_call.1} parent=1 // pred_check_branch
      %379 = sbr.rel (0) target = $region49
    $region48: #{tpu_custom_call.1} parent=1 // pred_region
      %381 = vsyncadd [#allocation4], 0
      %s383 = sshll.u32 [#allocation8], 4
      %s384 = int_to_ptr.vmem [resolvable:$true] %s383
      %s385 = sshll.u32 %s9, 4
      %s386 = int_to_ptr.hbm [resolvable:$true] %s385
      %388 = dma.vmem_to_hbm [thread:$0]  %s384, 128, %s386, [#allocation4]
    $region49: #{tpu_custom_call.1} parent=1 // pred_fallthru
      _
    // Predicated region
    $region50: #{tpu_custom_call.1} parent=1 // pred_check
      _
    $region51: #{tpu_custom_call.1} parent=1 // pred_check_branch
      %390 = sbr.rel (0) target = $region53
    $region52: #{tpu_custom_call.1} parent=1 // pred_region
      %392 = vsyncadd [#allocation5], 0
      %s394 = sshll.u32 %s10, 4
      %s395 = int_to_ptr.hbm [resolvable:$true] %s394
      %397 = dma.smem_to_hbm [#allocation9], 16, %s395, [#allocation5]
    $region53: #{tpu_custom_call.1} parent=1 // pred_fallthru
      _
    // Predicated region
    $region54: #{tpu_custom_call.1} parent=1 // pred_check
      _
    $region55: #{tpu_custom_call.1} parent=1 // pred_check_branch
      %399 = sbr.rel (0) target = $region57
    $region56: #{tpu_custom_call.1} parent=1 // pred_region
      %401 = dma.done [#allocation4], 128
    $region57: #{tpu_custom_call.1} parent=1 // pred_fallthru
      _
    // Predicated region
    $region58: #{tpu_custom_call.1} parent=1 // pred_check
      _
    $region59: #{tpu_custom_call.1} parent=1 // pred_check_branch
      %403 = sbr.rel (0) target = $region61
    $region60: #{tpu_custom_call.1} parent=1 // pred_region
      %405 = dma.done [#allocation5], 16
    $region61: #{tpu_custom_call.1} parent=1 // pred_fallthru
      _
    %406 = sfence
    %407 = vsyncpa [#allocation3], 1
    %408 = vsyncpa [#allocation7], 1
    %409 = vsyncpa [#allocation4], 1
    %410 = vsyncpa [#allocation5], 1

</llo_original>
